<compile_context>
chip_gen: v6e
topology: v6e:2x2x1
jax: 0.10.0
libtpu: 0.0.40
codegen_flags: <defaults>
</compile_context>

<pallas_src>
import jax
import jax.numpy as jnp
from jax.experimental import pallas as pl
from jax.experimental.pallas import tpu as pltpu

EPS = 1e-5
_LANE = 128
_VMEM_LIMIT = 48 * 1024 * 1024          # safe on v7x (64 MiB physical VMEM / TC)
_STREAM_BUDGET = 16 * 1024 * 1024       # bytes for double-buffered in+out tiles


def _round_up(x, n):
    return (x + n - 1) // n * n


def _cdiv(a, b):
    return (a + b - 1) // b


# ---- Phase 1: per-tile partial per-channel sum / sum-of-squares of z = W @ x -------
def _stats_kernel(x_ref, w_ref, sum_ref, sq_ref):
    # x_ref: (C_in, TL), w_ref: (C_out, C_in) -> z: (C_out, TL), f32 MXU accumulation.
    z = jnp.dot(w_ref[...], x_ref[...], preferred_element_type=jnp.float32)
    sum_ref[...] = jnp.sum(z, axis=1, keepdims=True)
    sq_ref[...] = jnp.sum(z * z, axis=1, keepdims=True)


# ---- Phase 2: o = a * (W @ x) + c  (conv + BN folded into one per-channel affine) --
def _project_kernel(x_ref, w_ref, a_ref, c_ref, o_ref):
    z = jnp.dot(w_ref[...], x_ref[...], preferred_element_type=jnp.float32)
    o_ref[...] = (z * a_ref[...] + c_ref[...]).astype(o_ref.dtype)


def _choose_l_tiling(l_out, c_in, c_out, itemsize):
    """Pick the lane tile so it is 128-aligned (or the full axis), the double-buffered
    in+out tiles fit a conservative VMEM budget, and L_out padding waste is small."""
    bytes_per_col = 2 * (c_in + c_out) * max(itemsize, 4)     # dbl-buffered, f32 worst case
    target = (_STREAM_BUDGET // max(bytes_per_col, 1)) // _LANE * _LANE
    target = max(2 * _LANE, min(2048, target))
    if l_out <= target:
        return l_out, 1, l_out                                # single full-axis tile, no pad
    num_l = _cdiv(l_out, target)
    tl = _round_up(_cdiv(l_out, num_l), _LANE)                # minimal 128-aligned tile
    return tl, num_l, num_l * tl


def shortcut_projection(x, weight, bias, gamma, beta, stride=1):
    """x: (N, C_in, L) NCL; weight: (C_out, C_in, 1); bias/gamma/beta: (C_out,).
    Returns (N, C_out, L_out) NCL, matching nn.BatchNorm1d(nn.Conv1d(k=1, stride)(x))
    in *training* mode (batch statistics, biased variance, eps=1e-5).

    NOTE: the conv bias cancels exactly under training-mode BatchNorm
    (mean_y = mean_z + b, var_y = var_z), so it is dropped.  Do NOT reuse this wrapper
    with eval-mode / running statistics."""
    del bias  # cancels analytically under training-mode BatchNorm (see docstring)
    n, c_in, _ = x.shape
    c_out = weight.shape[0]

    # kernel_size=1, stride=s conv == subsample the length axis (free when stride == 1).
    x_s = x[:, :, ::stride] if stride != 1 else x             # (N, C_in, L_out)
    l_out = x_s.shape[2]

    tl, num_l, l_out_p = _choose_l_tiling(l_out, c_in, c_out, x.dtype.itemsize)
    if l_out_p != l_out:
        # Zero columns contribute exactly 0 to the bias-free sum / sumsq, so the batch
        # statistics stay exact; padded output columns are cropped below.
        x_s = jnp.pad(x_s, ((0, 0), (0, 0), (0, l_out_p - l_out)))

    w2d = weight[:, :, 0]                                     # (C_out, C_in), native layout

    grid = (n, num_l)
    cparams = pltpu.CompilerParams(
        dimension_semantics=("parallel", "parallel"),
        vmem_limit_bytes=_VMEM_LIMIT)

    x_spec = pl.BlockSpec((None, c_in, tl), lambda b, j: (b, 0, j))
    w_spec = pl.BlockSpec((c_out, c_in), lambda b, j: (0, 0))          # weight resident
    stat_spec = pl.BlockSpec((None, None, c_out, 1), lambda b, j: (b, j, 0, 0))

    # ---- Phase 1: per-tile partial stats (fully parallel, tiny outputs) ----
    part_sum, part_sq = pl.pallas_call(
        _stats_kernel,
        grid=grid,
        in_specs=[x_spec, w_spec],
        out_specs=[stat_spec, stat_spec],
        out_shape=(
            jax.ShapeDtypeStruct((n, num_l, c_out, 1), jnp.float32),
            jax.ShapeDtypeStruct((n, num_l, c_out, 1), jnp.float32),
        ),
        compiler_params=cparams,
    )(x_s, w2d)

    # ---- Fold conv bias + BatchNorm into a single per-channel affine (a, c) ----
    #   o = gamma * (z - mean_z) * rsqrt(var_z + eps) + beta = a * z + c
    m = n * l_out                                             # true count (pads are zero)
    z_sum = jnp.sum(part_sum, axis=(0, 1))                    # (C_out, 1)
    z_sq = jnp.sum(part_sq, axis=(0, 1))                      # (C_out, 1)
    mean = z_sum / m
    var = jnp.maximum(z_sq / m - mean * mean, 0.0)            # clamp f32 cancellation
    a = gamma.astype(jnp.float32).reshape(-1, 1) * jax.lax.rsqrt(var + EPS)
    c = beta.astype(jnp.float32).reshape(-1, 1) - a * mean

    # ---- Phase 2: recompute z (no materialized intermediate) and normalize in NCL ----
    out = pl.pallas_call(
        _project_kernel,
        grid=grid,
        in_specs=[
            x_spec,
            w_spec,
            pl.BlockSpec((c_out, 1), lambda b, j: (0, 0)),    # a resident
            pl.BlockSpec((c_out, 1), lambda b, j: (0, 0)),    # c resident
        ],
        out_specs=pl.BlockSpec((None, c_out, tl), lambda b, j: (b, 0, j)),
        out_shape=jax.ShapeDtypeStruct((n, c_out, l_out_p), x.dtype),
        compiler_params=cparams,
    )(x_s, w2d, a, c)

    if l_out_p != l_out:
        out = out[:, :, :l_out]
    return out


def _reference(x, weight, bias, gamma, beta, stride=1):
    """Pure-JAX reference of bn(conv(x)) in training mode."""
    x_s = x[:, :, ::stride]
    y = jnp.einsum('ncl,oc->nol', x_s, weight[:, :, 0]) + bias[None, :, None]
    mean = jnp.mean(y, axis=(0, 2), keepdims=True)
    var = jnp.mean((y - mean) ** 2, axis=(0, 2), keepdims=True)
    y_hat = (y - mean) / jnp.sqrt(var + EPS)
    return y_hat * gamma[None, :, None] + beta[None, :, None]


if __name__ == "__main__":
    key = jax.random.PRNGKey(0)
    k_x, k_w, k_b = jax.random.split(key, 3)

    batch, in_channels, out_channels, length, stride = 2, 4, 8, 16, 2

    x = jax.random.normal(k_x, (batch, in_channels, length), dtype=jnp.float32)

    # Deterministic parameter init (PyTorch-style uniform bounds for conv)
    bound = 1.0 / (in_channels ** 0.5)
    weight = jax.random.uniform(k_w, (out_channels, in_channels, 1),
                                minval=-bound, maxval=bound, dtype=jnp.float32)
    bias = jax.random.uniform(k_b, (out_channels,),
                              minval=-bound, maxval=bound, dtype=jnp.float32)
    gamma = jnp.ones((out_channels,), dtype=jnp.float32)   # BN weight init
    beta = jnp.zeros((out_channels,), dtype=jnp.float32)   # BN bias init

    out = shortcut_projection(x, weight, bias, gamma, beta, stride=stride)
    out = jax.block_until_ready(out)

    ref = _reference(x, weight, bias, gamma, beta, stride=stride)
    assert out.shape == ref.shape, (out.shape, ref.shape)
    err = float(jnp.max(jnp.abs(out - ref)))
    assert err < 1e-4, err

    print("KERNEL_OK")
</pallas_src>

<mosaic_0001>
module attributes {stable_mosaic.version = 11 : i64} {
  func.func @_stats_kernel(%arg0: i32, %arg1: i32, %arg2: memref<1x4x8xf32, #tpu.memory_space<vmem>>, %arg3: memref<8x4xf32, #tpu.memory_space<vmem>>, %arg4: memref<1x1x8x1xf32, #tpu.memory_space<vmem>>, %arg5: memref<1x1x8x1xf32, #tpu.memory_space<vmem>>) attributes {dimension_semantics = [#tpu.dimension_semantics<parallel>, #tpu.dimension_semantics<parallel>], iteration_bounds = array<i64: 2, 1>, scalar_prefetch = 0 : i64, scratch_operands = 0 : i64, tpu.core_type = #tpu.core_type<tc>, window_params = [{transform_indices = @transform_0, window_bounds = array<i64: 1, 4, 8>}, {pipeline_mode = #tpu.pipeline_mode<synchronous>, transform_indices = @transform_1, window_bounds = array<i64: 8, 4>}, {transform_indices = @transform_2, window_bounds = array<i64: 1, 1, 8, 1>}, {transform_indices = @transform_3, window_bounds = array<i64: 1, 1, 8, 1>}]} {
    %c0 = arith.constant 0 : index
    %c0_0 = arith.constant 0 : index
    %0 = vector.load %arg3[%c0, %c0_0] : memref<8x4xf32, #tpu.memory_space<vmem>>, vector<8x4xf32>
    %c0_1 = arith.constant 0 : index
    %c0_2 = arith.constant 0 : index
    %c0_3 = arith.constant 0 : index
    %1 = vector.load %arg2[%c0_1, %c0_2, %c0_3] : memref<1x4x8xf32, #tpu.memory_space<vmem>>, vector<1x4x8xf32>
    %2 = vector.shape_cast %1 : vector<1x4x8xf32> to vector<4x8xf32>
    %cst = arith.constant dense<0.000000e+00> : vector<8x8xf32>
    %3 = tpu.matmul %0, %2, %cst {dimension_numbers = #tpu.dot_dimension_numbers<[1], [0], [0], [1], [0, 0, 1, 1], [], []>} : vector<8x4xf32>, vector<4x8xf32>, vector<8x8xf32> -> vector<8x8xf32>
    %cst_4 = arith.constant dense<0.000000e+00> : vector<8xf32>
    %4 = vector.multi_reduction <add>, %3, %cst_4 [1] : vector<8x8xf32> to vector<8xf32>
    %5 = vector.shape_cast %4 : vector<8xf32> to vector<8x1xf32>
    %c0_5 = arith.constant 0 : index
    %c0_6 = arith.constant 0 : index
    %c0_7 = arith.constant 0 : index
    %c0_8 = arith.constant 0 : index
    %6 = vector.load %arg4[%c0_5, %c0_6, %c0_7, %c0_8] : memref<1x1x8x1xf32, #tpu.memory_space<vmem>>, vector<1x1x8x1xf32>
    %7 = vector.shape_cast %6 : vector<1x1x8x1xf32> to vector<8x1xf32>
    %8 = vector.shape_cast %5 : vector<8x1xf32> to vector<1x1x8x1xf32>
    tpu.vector_store %arg4[%c0_5, %c0_6, %c0_7, %c0_8], %8 {strides = array<i32>} : memref<1x1x8x1xf32, #tpu.memory_space<vmem>>, vector<1x1x8x1xf32>,
    %9 = arith.mulf %3, %3 : vector<8x8xf32>
    %cst_9 = arith.constant dense<0.000000e+00> : vector<8xf32>
    %10 = vector.multi_reduction <add>, %9, %cst_9 [1] : vector<8x8xf32> to vector<8xf32>
    %11 = vector.shape_cast %10 : vector<8xf32> to vector<8x1xf32>
    %c0_10 = arith.constant 0 : index
    %c0_11 = arith.constant 0 : index
    %c0_12 = arith.constant 0 : index
    %c0_13 = arith.constant 0 : index
    %12 = vector.load %arg5[%c0_10, %c0_11, %c0_12, %c0_13] : memref<1x1x8x1xf32, #tpu.memory_space<vmem>>, vector<1x1x8x1xf32>
    %13 = vector.shape_cast %12 : vector<1x1x8x1xf32> to vector<8x1xf32>
    %14 = vector.shape_cast %11 : vector<8x1xf32> to vector<1x1x8x1xf32>
    tpu.vector_store %arg5[%c0_10, %c0_11, %c0_12, %c0_13], %14 {strides = array<i32>} : memref<1x1x8x1xf32, #tpu.memory_space<vmem>>, vector<1x1x8x1xf32>,
    return
  }
  func.func @transform_0(%arg0: i32, %arg1: i32) -> (i32, i32, i32) {
    %c0_i32 = arith.constant 0 : i32
    %c0_i32_0 = arith.constant 0 : i32
    return %arg0, %c0_i32, %arg1 : i32, i32, i32
  }
  func.func @transform_1(%arg0: i32, %arg1: i32) -> (i32, i32) {
    %c0_i32 = arith.constant 0 : i32
    %c0_i32_0 = arith.constant 0 : i32
    %c0_i32_1 = arith.constant 0 : i32
    return %c0_i32, %c0_i32_0 : i32, i32
  }
  func.func @transform_2(%arg0: i32, %arg1: i32) -> (i32, i32, i32, i32) {
    %c0_i32 = arith.constant 0 : i32
    %c0_i32_0 = arith.constant 0 : i32
    %c0_i32_1 = arith.constant 0 : i32
    return %arg0, %arg1, %c0_i32, %c0_i32_0 : i32, i32, i32, i32
  }
  func.func @transform_3(%arg0: i32, %arg1: i32) -> (i32, i32, i32, i32) {
    %c0_i32 = arith.constant 0 : i32
    %c0_i32_0 = arith.constant 0 : i32
    %c0_i32_1 = arith.constant 0 : i32
    return %arg0, %arg1, %c0_i32, %c0_i32_0 : i32, i32, i32, i32
  }
}

</mosaic_0001>

<llo_original>
// kernel: tpu_custom_call.1
$region0: #{tpu_custom_call.1}
  #allocation0 [shape = 'u32[]', space=smem, size = 0x4, offset = 0x4, fixed_abs, tag = 'smem constant byte address 0x4 - core index']
  #allocation1 [shape = 'u32[144,128]{1,0:T(1,128)}', space=vmem, size = 0x12000, scoped, tag = 'internal scratch']
  %s0 = inlined_call_operand.vmem [shape: f32[2,4,8], index: 0, kind: input, shape index: {}]
  %s1 = inlined_call_operand.vmem [shape: f32[8,4], index: 1, kind: input, shape index: {}]
  %s2 = inlined_call_operand.vmem [shape: f32[2,1,8,1], index: 2, kind: output, shape index: {0}]
  %s3 = inlined_call_operand.vmem [shape: f32[2,1,8,1], index: 3, kind: output, shape index: {1}]
  %4 = xla_tuple %s2, %s3
  %s5 = sld [smem:[#allocation0]]
  $region49: #{tpu_custom_call.1} parent=0
    _
  %s7 = ssub.s32 1, %s5
  %s8 = scalar_select 0, %s7, %s5
  loop: start=0, step=1, limit=4
  $region2: #{tpu_custom_call.1} parent=0 // loop_pre_header
    _
  $region3: #{tpu_custom_call.1} parent=0 // loop_header
    %s10 = sphi 0, %s14
    %p11 = scmp.ge.s32.totalorder %s10, 4
    %s17 = sphi 0, %s29
    %s18 = sphi 0, %s25
    %s19 = sphi 0, %s17
    %s20 = sphi 0, %s18
    %s21 = sphi 0, %s19
    %s22 = sphi 0, %s20
    %s34 = sphi 0, %s36
    %s37 = sphi 0, %s34
    %s38 = sphi 0, %s37
    %s54 = sphi 0, %s38
    %s58 = sphi 0, %s58
    %s60 = sphi 0, %s58
    %s61 = sphi 0, %s60
    %s75 = sphi 0, %s61
    %s83 = sphi 0, %s85
    %s86 = sphi 0, %s83
    %s87 = sphi 0, %s86
    %s103 = sphi 0, %s87
    %s111 = sphi 0, %s113
    %s114 = sphi 0, %s111
    %s115 = sphi 0, %s114
    %s131 = sphi 0, %s115
  $region4: #{tpu_custom_call.1} parent=0 // loop_header_branch
    %13 = sbr.rel (%p11) target = $region8
  $region5: #{tpu_custom_call.1} parent=0 // loop_body
    %s15 = ssub.s32 %s10, 1
    %s16 = ssub.s32 %s10, 2
    %s23 = sadd.s32 1, %s18
    %p24 = scmp.ge.s32.totalorder %s23, 1
    %s25 = scalar_select %p24, 0, %s23
    %s26 = sadd.s32 1, %s17
    %s27 = scalar_select %p24, %s26, %s17
    %p28 = scmp.ge.s32.totalorder %s27, 2
    %s29 = scalar_select %p28, 0, %s27
    %s30 = ssub.s32 %s17, %s29
    %s31 = ssub.s32 %s18, %s25
    %s32 = sor.u32 %s30, %s31
    %p33 = scmp.eq.s32.totalorder %s32, 0
    %s35 = sadd.s32 %s34, 1
    %s36 = scalar_select %p33, %s34, %s35
    %p39 = pneg %p33
    %p40 = scmp.eq.s32.totalorder %s10, 1
    %p41 = por %p39, %p40
    %p42 = scmp.ne.s32.totalorder %s34, %s37
    %p43 = scmp.eq.s32.totalorder %s10, 0
    %p44 = por %p42, %p43
    %p45 = scmp.ne.s32.totalorder %s34, %s37
    %p46 = scmp.eq.s32.totalorder %s15, 1
    %p47 = por %p45, %p46
    %p48 = scmp.ne.s32.totalorder %s37, %s38
    %p49 = scmp.eq.s32.totalorder %s15, 0
    %p50 = por %p48, %p49
    %p51 = scmp.ne.s32.totalorder %s37, %s38
    %p52 = scmp.eq.s32.totalorder %s16, 1
    %p53 = por %p51, %p52
    %p55 = scmp.ne.s32.totalorder %s38, %s54
    %p56 = scmp.eq.s32.totalorder %s16, 0
    %p57 = por %p55, %p56
    %s59 = sadd.s32 %s58, 1
    %p62 = scmp.eq.s32.totalorder %s10, 1
    %p63 = scmp.ne.s32.totalorder %s58, %s60
    %p64 = scmp.eq.s32.totalorder %s10, 0
    %p65 = por %p63, %p64
    %p66 = scmp.ne.s32.totalorder %s58, %s60
    %p67 = scmp.eq.s32.totalorder %s15, 1
    %p68 = por %p66, %p67
    %p69 = scmp.ne.s32.totalorder %s60, %s61
    %p70 = scmp.eq.s32.totalorder %s15, 0
    %p71 = por %p69, %p70
    %p72 = scmp.ne.s32.totalorder %s60, %s61
    %p73 = scmp.eq.s32.totalorder %s16, 1
    %p74 = por %p72, %p73
    %p76 = scmp.ne.s32.totalorder %s61, %s75
    %p77 = scmp.eq.s32.totalorder %s16, 0
    %p78 = por %p76, %p77
    %s79 = ssub.s32 %s17, %s29
    %s80 = ssub.s32 %s18, %s25
    %s81 = sor.u32 %s79, %s80
    %p82 = scmp.eq.s32.totalorder %s81, 0
    %s84 = sadd.s32 %s83, 1
    %s85 = scalar_select %p82, %s83, %s84
    %p88 = pneg %p82
    %p89 = scmp.eq.s32.totalorder %s10, 1
    %p90 = por %p88, %p89
    %p91 = scmp.ne.s32.totalorder %s83, %s86
    %p92 = scmp.eq.s32.totalorder %s10, 0
    %p93 = por %p91, %p92
    %p94 = scmp.ne.s32.totalorder %s83, %s86
    %p95 = scmp.eq.s32.totalorder %s15, 1
    %p96 = por %p94, %p95
    %p97 = scmp.ne.s32.totalorder %s86, %s87
    %p98 = scmp.eq.s32.totalorder %s15, 0
    %p99 = por %p97, %p98
    %p100 = scmp.ne.s32.totalorder %s86, %s87
    %p101 = scmp.eq.s32.totalorder %s16, 1
    %p102 = por %p100, %p101
    %p104 = scmp.ne.s32.totalorder %s87, %s103
    %p105 = scmp.eq.s32.totalorder %s16, 0
    %p106 = por %p104, %p105
    %s107 = ssub.s32 %s17, %s29
    %s108 = ssub.s32 %s18, %s25
    %s109 = sor.u32 %s107, %s108
    %p110 = scmp.eq.s32.totalorder %s109, 0
    %s112 = sadd.s32 %s111, 1
    %s113 = scalar_select %p110, %s111, %s112
    %p116 = pneg %p110
    %p117 = scmp.eq.s32.totalorder %s10, 1
    %p118 = por %p116, %p117
    %p119 = scmp.ne.s32.totalorder %s111, %s114
    %p120 = scmp.eq.s32.totalorder %s10, 0
    %p121 = por %p119, %p120
    %p122 = scmp.ne.s32.totalorder %s111, %s114
    %p123 = scmp.eq.s32.totalorder %s15, 1
    %p124 = por %p122, %p123
    %p125 = scmp.ne.s32.totalorder %s114, %s115
    %p126 = scmp.eq.s32.totalorder %s15, 0
    %p127 = por %p125, %p126
    %p128 = scmp.ne.s32.totalorder %s114, %s115
    %p129 = scmp.eq.s32.totalorder %s16, 1
    %p130 = por %p128, %p129
    %p132 = scmp.ne.s32.totalorder %s115, %s131
    %p133 = scmp.eq.s32.totalorder %s16, 0
    %p134 = por %p132, %p133
    %p135 = scmp.le.s32.totalorder 1, %s10
    %p136 = scmp.lt.s32.totalorder %s10, 3
    %p137 = pnand %p135, %p136
    %p138 = pneg %p137
    // Predicated region
    $region9: #{tpu_custom_call.1} parent=5 // pred_check
      _
    $region10: #{tpu_custom_call.1} parent=5 // pred_check_branch
      %140 = sbr.rel (%p137) target = $region12
    $region11: #{tpu_custom_call.1} parent=5 // pred_region
      %s141 = ssub.s32 %s10, 1
      // Predicated region
      $region13: #{tpu_custom_call.1} parent=11 // pred_check
        %p142 = pneg %p71
      $region14: #{tpu_custom_call.1} parent=11 // pred_check_branch
        %144 = sbr.rel (%p142) target = $region16
      $region15: #{tpu_custom_call.1} parent=11 // pred_region
        _
      $region16: #{tpu_custom_call.1} parent=11 // pred_fallthru
        _
    $region12: #{tpu_custom_call.1} parent=5 // pred_fallthru
      _
    %p145 = scmp.lt.s32.totalorder %s10, 2
    // Predicated region
    $region17: #{tpu_custom_call.1} parent=5 // pred_check
      %p146 = pneg %p145
    $region18: #{tpu_custom_call.1} parent=5 // pred_check_branch
      %148 = sbr.rel (%p146) target = $region20
    $region19: #{tpu_custom_call.1} parent=5 // pred_region
      // Predicated region
      $region21: #{tpu_custom_call.1} parent=19 // pred_check
        %p149 = pneg %p44
      $region22: #{tpu_custom_call.1} parent=19 // pred_check_branch
        %151 = sbr.rel (%p149) target = $region24
      $region23: #{tpu_custom_call.1} parent=19 // pred_region
        %p152 = scmp.lt.s32.totalorder %s17, 1
        %s153 = scalar_select %p152, %s17, 1
        %p154 = scmp.lt.s32.totalorder %s18, 0
        %s155 = scalar_select %p154, %s18, 0
        %s156 = sadd.s32 %s155, %s153
        %s157 = smul.addr %s156, 4
        %s158 = scalar_lea.vmem %s0, %s157
      $region24: #{tpu_custom_call.1} parent=19 // pred_fallthru
        _
    $region20: #{tpu_custom_call.1} parent=5 // pred_fallthru
      _
    %p159 = scmp.le.s32.totalorder 1, %s10
    %p160 = scmp.lt.s32.totalorder %s10, 3
    %p161 = pnand %p159, %p160
    %p162 = pneg %p161
    // Predicated region
    $region25: #{tpu_custom_call.1} parent=5 // pred_check
      _
    $region26: #{tpu_custom_call.1} parent=5 // pred_check_branch
      %164 = sbr.rel (%p161) target = $region28
    $region27: #{tpu_custom_call.1} parent=5 // pred_region
      %s165 = ssub.s32 %s10, 1
      %p166 = scmp.lt.s32.totalorder %s19, 1
      %s167 = scalar_select %p166, %s19, 1
      %p168 = scmp.lt.s32.totalorder %s20, 0
      %s169 = scalar_select %p168, %s20, 0
      %s170 = sadd.s32 %s169, %s167
      %s171 = smul.addr %s170, 4
      %s172 = scalar_lea.vmem %s0, %s171
      %p173 = pneg %p50
      %p174 = pneg %p47
      %p175 = pneg %p71
      %p176 = pneg %p68
      %p177 = pneg %p99
      %p178 = pneg %p96
      %p179 = scmp.lt.s32.totalorder %s19, 1
      %s180 = scalar_select %p179, %s19, 1
      %p181 = scmp.lt.s32.totalorder %s20, 0
      %s182 = scalar_select %p181, %s20, 0
      %s183 = sadd.s32 %s182, %s180
      %s184 = smul.addr %s183, 8
      %s185 = scalar_lea.vmem %s2, %s184
      %p186 = pneg %p127
      %p187 = pneg %p124
      %p188 = scmp.lt.s32.totalorder %s19, 1
      %s189 = scalar_select %p188, %s19, 1
      %p190 = scmp.lt.s32.totalorder %s20, 0
      %s191 = scalar_select %p190, %s20, 0
      %s192 = sadd.s32 %s191, %s189
      %s193 = smul.addr %s192, 8
      %s194 = scalar_lea.vmem %s3, %s193
      %p195 = scmp.lt.s32.totalorder %s19, 1
      %s196 = scalar_select %p195, %s19, 1
      %p197 = scmp.lt.s32.totalorder %s20, 0
      %s198 = scalar_select %p197, %s20, 0
      %s199 = sadd.s32 %s198, %s196
      %s200 = smul.addr %s199, 4
      %s201 = scalar_lea.vmem %s0, %s200
      %p202 = scmp.lt.s32.totalorder %s19, 1
      %s203 = scalar_select %p202, %s19, 1
      %p204 = scmp.lt.s32.totalorder %s20, 0
      %s205 = scalar_select %p204, %s20, 0
      %s206 = sadd.s32 %s205, %s203
      %s207 = smul.addr %s206, 8
      %s208 = scalar_lea.vmem %s2, %s207
      %p209 = scmp.lt.s32.totalorder %s19, 1
      %s210 = scalar_select %p209, %s19, 1
      %p211 = scmp.lt.s32.totalorder %s20, 0
      %s212 = scalar_select %p211, %s20, 0
      %s213 = sadd.s32 %s212, %s210
      %s214 = smul.addr %s213, 8
      %s215 = scalar_lea.vmem %s3, %s214
      %v216 = vld [vmem:[%s1] sm:$0xff]
      %v217 = vld [vmem:[%s201] sm:$0xf]
      %vm218 = vcmask 31744
      %v220 = vsel %vm218, %v216, 0
      %vm222 = vcmask 1043456
      %v224 = vsel %vm222, %v217, 0
      %226 = vmatprep.subr.mxu0 0.0
      %227 = vmatpush1.msra.mxu0 0.0
      %228 = vmatprep.subr.mxu0 0.0
      %229 = vmatpush1.msra.mxu0 0.0
      %230 = vmatprep.subr.mxu0 0.0
      %231 = vmatpush1.msra.mxu0 0.0
      %232 = vmatprep.subr.mxu0 0.0
      %233 = vmatpush1.msra.mxu0 0.0
      %234 = vmatprep.subr.mxu0 0.0
      %235 = vmatpush1.msra.mxu0 0.0
      %236 = vmatprep.subr.mxu0 0.0
      %237 = vmatpush1.msra.mxu0 0.0
      %238 = vmatprep.subr.mxu0 0.0
      %239 = vmatpush1.msra.mxu0 0.0
      %240 = vmatprep.subr.mxu0 0.0
      %241 = vmatpush1.msra.mxu0 0.0
      %242 = vmatprep.subr.mxu0 0.0
      %243 = vmatpush1.msra.mxu0 0.0
      %244 = vmatprep.subr.mxu0 0.0
      %245 = vmatpush1.msra.mxu0 0.0
      %246 = vmatprep.subr.mxu0 0.0
      %247 = vmatpush1.msra.mxu0 0.0
      %248 = vmatprep.subr.mxu0 0.0
      %249 = vmatpush1.msra.mxu0 0.0
      %250 = vmatprep.subr.mxu0 0.0
      %251 = vmatpush1.msra.mxu0 0.0
      %252 = vmatprep.subr.mxu0 0.0
      %253 = vmatpush1.msra.mxu0 0.0
      %254 = vmatprep.subr.mxu0 0.0
      %255 = vmatpush1.msra.mxu0 0.0
      %256 = vmatprep.subr.mxu0 0.0
      %257 = vmatpush1.msra.mxu0 %v224
      %258 = vmatprep.subr.mxu0 0.0
      %259 = vmatpush2.msra.mxu0 0.0
      %260 = vmatprep.subr.mxu0 0.0
      %261 = vmatpush2.msra.mxu0 0.0
      %262 = vmatprep.subr.mxu0 0.0
      %263 = vmatpush2.msra.mxu0 0.0
      %264 = vmatprep.subr.mxu0 0.0
      %265 = vmatpush2.msra.mxu0 0.0
      %266 = vmatprep.subr.mxu0 0.0
      %267 = vmatpush2.msra.mxu0 0.0
      %268 = vmatprep.subr.mxu0 0.0
      %269 = vmatpush2.msra.mxu0 0.0
      %270 = vmatprep.subr.mxu0 0.0
      %271 = vmatpush2.msra.mxu0 0.0
      %272 = vmatprep.subr.mxu0 0.0
      %273 = vmatpush2.msra.mxu0 0.0
      %274 = vmatprep.subr.mxu0 0.0
      %275 = vmatpush2.msra.mxu0 0.0
      %276 = vmatprep.subr.mxu0 0.0
      %277 = vmatpush2.msra.mxu0 0.0
      %278 = vmatprep.subr.mxu0 0.0
      %279 = vmatpush2.msra.mxu0 0.0
      %280 = vmatprep.subr.mxu0 0.0
      %281 = vmatpush2.msra.mxu0 0.0
      %282 = vmatprep.subr.mxu0 0.0
      %283 = vmatpush2.msra.mxu0 0.0
      %284 = vmatprep.subr.mxu0 0.0
      %285 = vmatpush2.msra.mxu0 0.0
      %286 = vmatprep.subr.mxu0 0.0
      %287 = vmatpush2.msra.mxu0 0.0
      %288 = vmatprep.subr.mxu0 0.0
      %289 = vmatpush2.msra.mxu0 0.0
      %290 = vmatprep.mubr.f32.mxu0 0.0
      %291 = vmatmul.mubr.f32.gmra.mxu0 %v220
      %v292 = vpop.f32.mrf.mxu0
      %v293 = vadd.f32 0.0, %v292
      %v294 = vpop.f32.mrf.mxu0
      %295 = vdwg.mxu0
      %vm296 = vcmask 64512
      %v297 = vsel %vm296, %v293, 0.0
      %298 = vadd.xlane.f32.xlu0 %v297
      %v299 = vpop.xlane.xlu0 %298
      %vm300 = vcmask 7168
      %301 = vst.msk [vmem:[%s208] sm:$0xff] %vm300, %v299
      %v302 = vmul.f32 %v293, %v293
      %v303 = vsel %vm296, %v302, 0.0
      %304 = vadd.xlane.f32.xlu0 %v303
      %v305 = vpop.xlane.xlu0 %304
      %306 = vst.msk [vmem:[%s215] sm:$0xff] %vm300, %v305
      %p307 = scmp.lt.s32.totalorder %s19, 1
      %s308 = scalar_select %p307, %s19, 1
      %p309 = scmp.lt.s32.totalorder %s20, 0
      %s310 = scalar_select %p309, %s20, 0
      %s311 = sadd.s32 %s310, %s308
      %s312 = smul.addr %s311, 8
      %s313 = scalar_lea.vmem %s2, %s312
      %p314 = scmp.lt.s32.totalorder %s19, 1
      %s315 = scalar_select %p314, %s19, 1
      %p316 = scmp.lt.s32.totalorder %s20, 0
      %s317 = scalar_select %p316, %s20, 0
      %s318 = sadd.s32 %s317, %s315
      %s319 = smul.addr %s318, 8
      %s320 = scalar_lea.vmem %s3, %s319
      // Predicated region
      $region29: #{tpu_custom_call.1} parent=27 // pred_check
        %p321 = pneg %p96
      $region30: #{tpu_custom_call.1} parent=27 // pred_check_branch
        %323 = sbr.rel (%p321) target = $region32
      $region31: #{tpu_custom_call.1} parent=27 // pred_region
        _
      $region32: #{tpu_custom_call.1} parent=27 // pred_fallthru
        _
      // Predicated region
      $region33: #{tpu_custom_call.1} parent=27 // pred_check
        %p324 = pneg %p124
      $region34: #{tpu_custom_call.1} parent=27 // pred_check_branch
        %326 = sbr.rel (%p324) target = $region36
      $region35: #{tpu_custom_call.1} parent=27 // pred_region
        _
      $region36: #{tpu_custom_call.1} parent=27 // pred_fallthru
        _
    $region28: #{tpu_custom_call.1} parent=5 // pred_fallthru
      _
    %p327 = scmp.le.s32.totalorder 2, %s10
    // Predicated region
    $region37: #{tpu_custom_call.1} parent=5 // pred_check
      %p328 = pneg %p327
    $region38: #{tpu_custom_call.1} parent=5 // pred_check_branch
      %330 = sbr.rel (%p328) target = $region40
    $region39: #{tpu_custom_call.1} parent=5 // pred_region
      %s331 = ssub.s32 %s10, 2
      // Predicated region
      $region41: #{tpu_custom_call.1} parent=39 // pred_check
        %p332 = pneg %p102
      $region42: #{tpu_custom_call.1} parent=39 // pred_check_branch
        %334 = sbr.rel (%p332) target = $region44
      $region43: #{tpu_custom_call.1} parent=39 // pred_region
        %p335 = scmp.lt.s32.totalorder %s21, 1
        %s336 = scalar_select %p335, %s21, 1
        %p337 = scmp.lt.s32.totalorder %s22, 0
        %s338 = scalar_select %p337, %s22, 0
        %s339 = sadd.s32 %s338, %s336
        %s340 = smul.addr %s339, 8
        %s341 = scalar_lea.vmem %s2, %s340
      $region44: #{tpu_custom_call.1} parent=39 // pred_fallthru
        _
      // Predicated region
      $region45: #{tpu_custom_call.1} parent=39 // pred_check
        %p342 = pneg %p130
      $region46: #{tpu_custom_call.1} parent=39 // pred_check_branch
        %344 = sbr.rel (%p342) target = $region48
      $region47: #{tpu_custom_call.1} parent=39 // pred_region
        %p345 = scmp.lt.s32.totalorder %s21, 1
        %s346 = scalar_select %p345, %s21, 1
        %p347 = scmp.lt.s32.totalorder %s22, 0
        %s348 = scalar_select %p347, %s22, 0
        %s349 = sadd.s32 %s348, %s346
        %s350 = smul.addr %s349, 8
        %s351 = scalar_lea.vmem %s3, %s350
      $region48: #{tpu_custom_call.1} parent=39 // pred_fallthru
        _
    $region40: #{tpu_custom_call.1} parent=5 // pred_fallthru
      _
  $region6: #{tpu_custom_call.1} parent=0 // loop_footer
    %s14 = sadd.s32 1, %s10
  $region7: #{tpu_custom_call.1} parent=0 // loop_footer_branch
    %9 = sbr.rel target = $region3
  $region8: #{tpu_custom_call.1} parent=0 // loop_exit
    _

</llo_original>
